<compile_context>
chip_gen: v7x
topology: tpu7x:2x2x1
jax: 0.10.0
libtpu: 0.0.40
codegen_flags: <defaults>
</compile_context>

<pallas_src>
import functools
import jax
import jax.numpy as jnp
from jax.experimental import pallas as pl
from jax.experimental.pallas import tpu as pltpu

LN_EPS = 1e-5  # PyTorch nn.LayerNorm default


def _linear_layer_kernel(x_ref, gamma_ref, beta_ref, w_ref, bias_ref, o_ref,
                         *, layer_norm: bool, relu: bool):
    # x_ref: (TM, D_in) row tile;  w_ref: (D_in, D_out_p);  o_ref: (TM, D_out_p)
    x = x_ref[...]

    if layer_norm:
        xf = x.astype(jnp.float32)
        mean = jnp.mean(xf, axis=-1, keepdims=True)
        var = jnp.mean(jnp.square(xf - mean), axis=-1, keepdims=True)
        xf = (xf - mean) * jax.lax.rsqrt(var + LN_EPS)
        # (1, D_in) params broadcast implicitly against the (TM, D_in) tile.
        xf = xf * gamma_ref[...].astype(jnp.float32) \
                + beta_ref[...].astype(jnp.float32)
        lhs = xf.astype(w_ref.dtype)          # feed MXU in the weight dtype (bf16 stays bf16)
    else:
        lhs = x.astype(w_ref.dtype)

    # TODO(synk): nn.Dropout is identity at inference time; training-mode dropout
    # (random mask + 1/(1-p) scaling) is not implemented here.

    # Linear: y = x @ W + b, f32 accumulation on the MXU.
    y = jnp.dot(lhs, w_ref[...], preferred_element_type=jnp.float32)
    y = y + bias_ref[...].astype(jnp.float32)

    if relu:
        y = jnp.maximum(y, 0.0)

    o_ref[...] = y.astype(o_ref.dtype)


def _round_up(v, m):
    return ((v + m - 1) // m) * m


def _pick_tm(rows, d_in, d_out_p, x_itemsize, w_itemsize, out_itemsize,
             vmem_budget_bytes=24 * 1024 * 1024, tm_cap=1024):
    """Pick the largest row tile (multiple of 8, <=tm_cap) whose double-buffered
    pipeline footprint fits a budget that is safe on v5e/v6e/v7x."""
    # grid-invariant buffers: double-buffered weight + (tiny) gamma/beta/bias
    fixed = 2 * d_in * d_out_p * w_itemsize + 4 * d_in * 4 + 2 * d_out_p * 4
    # per-row cost: double-buffered x tile + double-buffered output tile
    per_row = 2 * d_in * x_itemsize + 2 * d_out_p * out_itemsize
    avail = max(vmem_budget_bytes - fixed, 8 * per_row)
    tm = min(tm_cap, avail // per_row)
    tm = max(8, (tm // 8) * 8)
    # no point tiling wider than the (8-rounded) number of rows
    tm = min(tm, _round_up(max(rows, 1), 8))
    return int(tm)


def linear_layer_forward(x, gamma, beta, w, bias, *,
                         layer_norm=True, relu=True, tm=None):
    """x: (N, L, D_in) -> (N, L, D_out). w: (D_in, D_out) (= torch weight.T), bias: (D_out,)."""
    N, L, D_in = x.shape
    D_out = w.shape[1]
    rows = N * L
    x2 = x.reshape(rows, D_in)   # no jnp.pad of activations: ragged last block via cdiv grid

    # Lane-dense output: pad the (small, grid-invariant) weight/bias so the
    # output's last dim is a multiple of 128 (full-width stores, no vst.msk).
    D_out_p = _round_up(D_out, 128)
    if D_out_p != D_out:
        w = jnp.pad(w, ((0, 0), (0, D_out_p - D_out)))
        bias = jnp.pad(bias, (0, D_out_p - D_out))

    gamma2 = gamma.reshape(1, D_in)
    beta2 = beta.reshape(1, D_in)
    bias2 = bias.reshape(1, D_out_p)

    out_dtype = x.dtype
    if tm is None:
        tm = _pick_tm(rows, D_in, D_out_p,
                      jnp.dtype(x.dtype).itemsize,
                      jnp.dtype(w.dtype).itemsize,
                      jnp.dtype(out_dtype).itemsize)

    grid = (pl.cdiv(rows, tm),)

    kernel = functools.partial(_linear_layer_kernel,
                               layer_norm=layer_norm, relu=relu)

    # NOTE: the weight BlockSpec is grid-invariant (index_map always (0,0)); the
    # default double-buffer cost for it is accounted for in _pick_tm's budget.
    out = pl.pallas_call(
        kernel,
        out_shape=jax.ShapeDtypeStruct((rows, D_out_p), out_dtype),
        grid_spec=pltpu.PrefetchScalarGridSpec(
            num_scalar_prefetch=0,
            grid=grid,
            in_specs=[
                pl.BlockSpec((tm, D_in), lambda i: (i, 0)),        # x row-tile
                pl.BlockSpec((1, D_in), lambda i: (0, 0)),         # gamma
                pl.BlockSpec((1, D_in), lambda i: (0, 0)),         # beta
                pl.BlockSpec((D_in, D_out_p), lambda i: (0, 0)),   # weight (full, padded)
                pl.BlockSpec((1, D_out_p), lambda i: (0, 0)),      # bias (padded)
            ],
            out_specs=pl.BlockSpec((tm, D_out_p), lambda i: (i, 0)),
        ),
        compiler_params=pltpu.CompilerParams(
            dimension_semantics=("parallel",),          # shards row-grid across v7x's 2 TCs
            vmem_limit_bytes=48 * 1024 * 1024,          # explicit: safe on 64 MiB (v7x) too
        ),
    )(x2, gamma2, beta2, w, bias2)

    return out[:, :D_out].reshape(N, L, D_out)


def reference_forward(x, gamma, beta, w, bias, *, layer_norm=True, relu=True):
    xf = x.astype(jnp.float32)
    if layer_norm:
        mean = jnp.mean(xf, axis=-1, keepdims=True)
        var = jnp.mean((xf - mean) ** 2, axis=-1, keepdims=True)
        xf = (xf - mean) * jax.lax.rsqrt(var + LN_EPS)
        xf = xf * gamma + beta
    y = xf @ w + bias
    if relu:
        y = jnp.maximum(y, 0.0)
    return y.astype(x.dtype)


if __name__ == "__main__":
    # module config: LinearLayer(in_hsz=32, out_hsz=32, layer_norm=True,
    #                            dropout=0.1, relu=True), eval mode
    N, L, D_in, D_out = 2, 8, 32, 32

    key = jax.random.PRNGKey(0)
    kx, kg, kb, kw, kbias = jax.random.split(key, 5)

    x = jax.random.normal(kx, (N, L, D_in), dtype=jnp.float32)

    # deterministic synthetic parameters (shapes match nn.LayerNorm(in_hsz) and
    # nn.Linear(in_hsz, out_hsz); weight stored as (D_in, D_out) = W.T)
    gamma = 1.0 + 0.01 * jax.random.normal(kg, (D_in,), dtype=jnp.float32)
    beta = 0.01 * jax.random.normal(kb, (D_in,), dtype=jnp.float32)
    w = jax.random.normal(kw, (D_in, D_out), dtype=jnp.float32) / jnp.sqrt(D_in)
    bias = 0.01 * jax.random.normal(kbias, (D_out,), dtype=jnp.float32)

    out = linear_layer_forward(x, gamma, beta, w, bias,
                               layer_norm=True, relu=True)
    out = jax.block_until_ready(out)

    ref = reference_forward(x, gamma, beta, w, bias, layer_norm=True, relu=True)
    assert out.shape == (N, L, D_out)
    assert jnp.allclose(out, ref, atol=1e-5, rtol=1e-5), "mismatch vs reference"

    print("KERNEL_OK")
</pallas_src>

<mosaic_0001>
module attributes {stable_mosaic.version = 11 : i64} {
  func.func @_linear_layer_kernel(%arg0: i32, %arg1: memref<16x32xf32, #tpu.memory_space<vmem>>, %arg2: memref<1x32xf32, #tpu.memory_space<vmem>>, %arg3: memref<1x32xf32, #tpu.memory_space<vmem>>, %arg4: memref<32x128xf32, #tpu.memory_space<vmem>>, %arg5: memref<1x128xf32, #tpu.memory_space<vmem>>, %arg6: memref<16x128xf32, #tpu.memory_space<vmem>>) attributes {dimension_semantics = [#tpu.dimension_semantics<parallel>], iteration_bounds = array<i64: 1>, scalar_prefetch = 0 : i64, scratch_operands = 0 : i64, tpu.core_type = #tpu.core_type<tc>, window_params = [{transform_indices = @transform_0, window_bounds = array<i64: 16, 32>}, {pipeline_mode = #tpu.pipeline_mode<synchronous>, transform_indices = @transform_1, window_bounds = array<i64: 1, 32>}, {pipeline_mode = #tpu.pipeline_mode<synchronous>, transform_indices = @transform_2, window_bounds = array<i64: 1, 32>}, {pipeline_mode = #tpu.pipeline_mode<synchronous>, transform_indices = @transform_3, window_bounds = array<i64: 32, 128>}, {pipeline_mode = #tpu.pipeline_mode<synchronous>, transform_indices = @transform_4, window_bounds = array<i64: 1, 128>}, {transform_indices = @transform_5, window_bounds = array<i64: 16, 128>}]} {
    %c0 = arith.constant 0 : index
    %c0_0 = arith.constant 0 : index
    %0 = vector.load %arg1[%c0, %c0_0] : memref<16x32xf32, #tpu.memory_space<vmem>>, vector<16x32xf32>
    %cst = arith.constant dense<0.000000e+00> : vector<16xf32>
    %1 = vector.multi_reduction <add>, %0, %cst [1] : vector<16x32xf32> to vector<16xf32>
    %2 = vector.shape_cast %1 : vector<16xf32> to vector<16x1xf32>
    %cst_1 = arith.constant 3.200000e+01 : f32
    %3 = vector.broadcast %cst_1 : f32 to vector<16x1xf32>
    %4 = arith.divf %2, %3 : vector<16x1xf32>
    %5 = vector.broadcast %4 : vector<16x1xf32> to vector<16x32xf32>
    %6 = arith.subf %0, %5 : vector<16x32xf32>
    %7 = arith.mulf %6, %6 : vector<16x32xf32>
    %cst_2 = arith.constant dense<0.000000e+00> : vector<16xf32>
    %8 = vector.multi_reduction <add>, %7, %cst_2 [1] : vector<16x32xf32> to vector<16xf32>
    %9 = vector.shape_cast %8 : vector<16xf32> to vector<16x1xf32>
    %cst_3 = arith.constant 3.200000e+01 : f32
    %10 = vector.broadcast %cst_3 : f32 to vector<16x1xf32>
    %11 = arith.divf %9, %10 : vector<16x1xf32>
    %12 = vector.broadcast %4 : vector<16x1xf32> to vector<16x32xf32>
    %13 = arith.subf %0, %12 : vector<16x32xf32>
    %cst_4 = arith.constant 9.99999974E-6 : f32
    %14 = vector.broadcast %cst_4 : f32 to vector<16x1xf32>
    %15 = arith.addf %11, %14 : vector<16x1xf32>
    %16 = math.rsqrt %15 : vector<16x1xf32>
    %17 = vector.broadcast %16 : vector<16x1xf32> to vector<16x32xf32>
    %18 = arith.mulf %13, %17 : vector<16x32xf32>
    %c0_5 = arith.constant 0 : index
    %c0_6 = arith.constant 0 : index
    %19 = vector.load %arg2[%c0_5, %c0_6] : memref<1x32xf32, #tpu.memory_space<vmem>>, vector<1x32xf32>
    %20 = vector.broadcast %19 : vector<1x32xf32> to vector<16x32xf32>
    %21 = arith.mulf %18, %20 : vector<16x32xf32>
    %c0_7 = arith.constant 0 : index
    %c0_8 = arith.constant 0 : index
    %22 = vector.load %arg3[%c0_7, %c0_8] : memref<1x32xf32, #tpu.memory_space<vmem>>, vector<1x32xf32>
    %23 = vector.broadcast %22 : vector<1x32xf32> to vector<16x32xf32>
    %24 = arith.addf %21, %23 : vector<16x32xf32>
    %c0_9 = arith.constant 0 : index
    %c0_10 = arith.constant 0 : index
    %25 = vector.load %arg4[%c0_9, %c0_10] : memref<32x128xf32, #tpu.memory_space<vmem>>, vector<32x128xf32>
    %cst_11 = arith.constant dense<0.000000e+00> : vector<16x128xf32>
    %26 = tpu.matmul %24, %25, %cst_11 {dimension_numbers = #tpu.dot_dimension_numbers<[1], [0], [0], [1], [0, 0, 1, 1], [], []>} : vector<16x32xf32>, vector<32x128xf32>, vector<16x128xf32> -> vector<16x128xf32>
    %c0_12 = arith.constant 0 : index
    %c0_13 = arith.constant 0 : index
    %27 = vector.load %arg5[%c0_12, %c0_13] : memref<1x128xf32, #tpu.memory_space<vmem>>, vector<1x128xf32>
    %28 = vector.broadcast %27 : vector<1x128xf32> to vector<16x128xf32>
    %29 = arith.addf %26, %28 : vector<16x128xf32>
    %cst_14 = arith.constant 0.000000e+00 : f32
    %30 = vector.broadcast %cst_14 : f32 to vector<16x128xf32>
    %31 = arith.maximumf %29, %30 : vector<16x128xf32>
    %c0_15 = arith.constant 0 : index
    %c0_16 = arith.constant 0 : index
    %32 = vector.load %arg6[%c0_15, %c0_16] : memref<16x128xf32, #tpu.memory_space<vmem>>, vector<16x128xf32>
    tpu.vector_store %arg6[%c0_15, %c0_16], %31 {strides = array<i32>} : memref<16x128xf32, #tpu.memory_space<vmem>>, vector<16x128xf32>,
    return
  }
  func.func @transform_0(%arg0: i32) -> (i32, i32) {
    %c0_i32 = arith.constant 0 : i32
    %c0_i32_0 = arith.constant 0 : i32
    return %arg0, %c0_i32 : i32, i32
  }
  func.func @transform_1(%arg0: i32) -> (i32, i32) {
    %c0_i32 = arith.constant 0 : i32
    %c0_i32_0 = arith.constant 0 : i32
    %c0_i32_1 = arith.constant 0 : i32
    return %c0_i32, %c0_i32_0 : i32, i32
  }
  func.func @transform_2(%arg0: i32) -> (i32, i32) {
    %c0_i32 = arith.constant 0 : i32
    %c0_i32_0 = arith.constant 0 : i32
    %c0_i32_1 = arith.constant 0 : i32
    return %c0_i32, %c0_i32_0 : i32, i32
  }
  func.func @transform_3(%arg0: i32) -> (i32, i32) {
    %c0_i32 = arith.constant 0 : i32
    %c0_i32_0 = arith.constant 0 : i32
    %c0_i32_1 = arith.constant 0 : i32
    return %c0_i32, %c0_i32_0 : i32, i32
  }
  func.func @transform_4(%arg0: i32) -> (i32, i32) {
    %c0_i32 = arith.constant 0 : i32
    %c0_i32_0 = arith.constant 0 : i32
    %c0_i32_1 = arith.constant 0 : i32
    return %c0_i32, %c0_i32_0 : i32, i32
  }
  func.func @transform_5(%arg0: i32) -> (i32, i32) {
    %c0_i32 = arith.constant 0 : i32
    %c0_i32_0 = arith.constant 0 : i32
    return %arg0, %c0_i32 : i32, i32
  }
}

</mosaic_0001>

<llo_original>
// kernel: tpu_custom_call.1
$region0: #{tpu_custom_call.1}
  #allocation0 [shape = 'u32[]', space=smem, size = 0x4, offset = 0x4, fixed_abs, tag = 'smem constant byte address 0x4 - core index']
  #allocation1 [shape = 'u32[144,128]{1,0:T(1,128)}', space=vmem, size = 0x12000, scoped, tag = 'internal scratch']
  %s0 = inlined_call_operand.hbm [shape: f32[16,32], index: 0, kind: input, shape index: {}]
  %s1 = inlined_call_operand.vmem [shape: f32[1,32], index: 1, kind: input, shape index: {}]
  %s2 = inlined_call_operand.vmem [shape: f32[1,32], index: 2, kind: input, shape index: {}]
  %s3 = inlined_call_operand.hbm [shape: f32[32,128], index: 3, kind: input, shape index: {}]
  %s4 = inlined_call_operand.vmem [shape: f32[1,128], index: 4, kind: input, shape index: {}]
  %s5 = inlined_call_operand.hbm [shape: f32[16,128], index: 5, kind: output, shape index: {}]
  %s6 = sld [smem:[#allocation0]]
  $region38: #{tpu_custom_call.1} parent=0
    _
  %s8 = ssub.s32 1, %s6
  %s9 = scalar_select 0, %s8, %s6
  $region1: #{tpu_custom_call.1} parent=0
    #allocation2 [shape = 'u8[8192]{0}', space=vmem, size = 0x2000, scoped, tag = 'input window, operand 0, single buffered']
    #allocation3 [shape = 's32[1]{0}', space=sflag, size = 0x4, scoped, tag = 'scoped memory for tpu_custom_call.1']
    #allocation4 [shape = 's32[1]{0}', space=sflag, size = 0x4, scoped, tag = 'scoped memory for tpu_custom_call.1']
    #allocation5 [shape = 'u8[16384]{0}', space=vmem, size = 0x4000, scoped, tag = 'input window, operand 3, single buffered']
    #allocation6 [shape = 's32[1]{0}', space=sflag, size = 0x4, scoped, tag = 'scoped memory for tpu_custom_call.1']
    #allocation7 [shape = 'u8[8192]{0}', space=vmem, size = 0x2000, scoped, tag = 'output window, operand 0, single buffered']
    %10 = vsyncpa [#allocation3], 0
    %11 = vsyncpa [#allocation6], 0
    %12 = vsyncpa [#allocation4], 0
    // Predicated region
    $region2: #{tpu_custom_call.1} parent=1 // pred_check
      _
    $region3: #{tpu_custom_call.1} parent=1 // pred_check_branch
      %14 = sbr.rel (0) target = $region5
    $region4: #{tpu_custom_call.1} parent=1 // pred_region
      %s16 = ssub.s32 256, 256
      %17 = vsyncadd [#allocation3], %s16
      %s18 = sshll.u32 [#allocation2], 4
      %s19 = int_to_ptr.vmem [resolvable:$true] %s18
      %24 = dma.hbm_to_vmem [thread:$0]  %s0, 256, %s19, [#allocation3], 128, 128, 8
    $region5: #{tpu_custom_call.1} parent=1 // pred_fallthru
      _
    // Predicated region
    $region6: #{tpu_custom_call.1} parent=1 // pred_check
      _
    $region7: #{tpu_custom_call.1} parent=1 // pred_check_branch
      %26 = sbr.rel (0) target = $region9
    $region8: #{tpu_custom_call.1} parent=1 // pred_region
      _
    $region9: #{tpu_custom_call.1} parent=1 // pred_fallthru
      _
    // Predicated region
    $region10: #{tpu_custom_call.1} parent=1 // pred_check
      _
    $region11: #{tpu_custom_call.1} parent=1 // pred_check_branch
      %28 = sbr.rel (0) target = $region13
    $region12: #{tpu_custom_call.1} parent=1 // pred_region
      _
    $region13: #{tpu_custom_call.1} parent=1 // pred_fallthru
      _
    // Predicated region
    $region14: #{tpu_custom_call.1} parent=1 // pred_check
      _
    $region15: #{tpu_custom_call.1} parent=1 // pred_check_branch
      %30 = sbr.rel (0) target = $region17
    $region16: #{tpu_custom_call.1} parent=1 // pred_region
      %s32 = ssub.s32 512, 512
      %33 = vsyncadd [#allocation6], %s32
      %s34 = sshll.u32 [#allocation5], 4
      %s35 = int_to_ptr.vmem [resolvable:$true] %s34
      %40 = dma.hbm_to_vmem [thread:$0]  %s3, 512, %s35, [#allocation6], 128, 128, 8
    $region17: #{tpu_custom_call.1} parent=1 // pred_fallthru
      _
    // Predicated region
    $region18: #{tpu_custom_call.1} parent=1 // pred_check
      _
    $region19: #{tpu_custom_call.1} parent=1 // pred_check_branch
      %42 = sbr.rel (0) target = $region21
    $region20: #{tpu_custom_call.1} parent=1 // pred_region
      _
    $region21: #{tpu_custom_call.1} parent=1 // pred_fallthru
      _
    // Predicated region
    $region22: #{tpu_custom_call.1} parent=1 // pred_check
      _
    $region23: #{tpu_custom_call.1} parent=1 // pred_check_branch
      %44 = sbr.rel (0) target = $region25
    $region24: #{tpu_custom_call.1} parent=1 // pred_region
      %45 = dma.done [#allocation3], 256
    $region25: #{tpu_custom_call.1} parent=1 // pred_fallthru
      _
    // Predicated region
    $region26: #{tpu_custom_call.1} parent=1 // pred_check
      _
    $region27: #{tpu_custom_call.1} parent=1 // pred_check_branch
      %47 = sbr.rel (0) target = $region29
    $region28: #{tpu_custom_call.1} parent=1 // pred_region
      %48 = dma.done [#allocation6], 512
    $region29: #{tpu_custom_call.1} parent=1 // pred_fallthru
      _
    %v49 = vld [vmem:[#allocation2] sm:$0xff]
    %v50 = vld [vmem:[#allocation2 + $0x8] sm:$0xff]
    %vm51 = vcmask 261120
    %v52 = vsel %vm51, %v49, 0.0
    %53 = vadd.xlane.f32.xlu0 %v52
    %v54 = vpop.xlane.xlu0 %53
    %v55 = vsel %vm51, %v50, 0.0
    %56 = vadd.xlane.f32.xlu0 %v55
    %v57 = vpop.xlane.xlu0 %56
    %v58 = vrcp.pop 32.0
    %v59 = vmul.f32 %v54, %v58
    %v60 = vmul.f32 %v57, %v58
    %v61 = vsub.f32 %v49, %v59
    %v62 = vsub.f32 %v50, %v60
    %v63 = vmul.f32 %v61, %v61
    %v64 = vmul.f32 %v62, %v62
    %v65 = vsel %vm51, %v63, 0.0
    %66 = vadd.xlane.f32.xlu0 %v65
    %v67 = vpop.xlane.xlu0 %66
    %v68 = vsel %vm51, %v64, 0.0
    %69 = vadd.xlane.f32.xlu0 %v68
    %v70 = vpop.xlane.xlu0 %69
    %v71 = vmul.f32 %v67, %v58
    %v72 = vmul.f32 %v70, %v58
    %v73 = vadd.f32 %v71, 1e-05
    %v74 = vadd.f32 %v72, 1e-05
    %v75 = vrsqrt.pop %v73
    %v76 = vrsqrt.pop %v74
    %v77 = vmul.f32 %v61, %v75
    %v78 = vmul.f32 %v62, %v76
    %v79 = vld [vmem:[%s1] sm:$0x1]
    %v81 = vlaneseq
    %v82 = vshrl.u32 %v81, 7
    %v83 = vsub.s32 0, %v82
    %v84 = vrot.slane %v79, %v83
    %v86 = vmul.f32 %v77, %v84
    %v87 = vmul.f32 %v78, %v84
    %v88 = vld [vmem:[%s2] sm:$0x1]
    %v90 = vlaneseq
    %v91 = vshrl.u32 %v90, 7
    %v92 = vsub.s32 0, %v91
    %v93 = vrot.slane %v88, %v92
    %v95 = vadd.f32 %v86, %v93
    %v96 = vadd.f32 %v87, %v93
    %v97 = vld [vmem:[#allocation5] sm:$0xff]
    %v98 = vld [vmem:[#allocation5 + $0x8] sm:$0xff]
    %v99 = vld [vmem:[#allocation5 + $0x10] sm:$0xff]
    %v100 = vld [vmem:[#allocation5 + $0x18] sm:$0xff]
    %v101 = vld [vmem:[%s4] sm:$0x1]
    %v103 = vlaneseq
    %v104 = vshrl.u32 %v103, 7
    %v105 = vsub.s32 0, %v104
    %v106 = vrot.slane %v101, %v105
    %v109 = vsel %vm51, %v95, 0
    %v112 = vsel %vm51, %v96, 0
    %114 = vmatprep.subr.mxu0 0.0
    %115 = vmatpush1.msra.mxu0 %v97
    %116 = vmatprep.subr.mxu0 0.0
    %117 = vmatpush1.msra.mxu0 %v98
    %118 = vmatprep.subr.mxu0 0.0
    %119 = vmatpush1.msra.mxu0 %v99
    %120 = vmatprep.subr.mxu0 0.0
    %121 = vmatpush1.msra.mxu0 %v100
    %122 = vmatprep.subr.mxu0 0.0
    %123 = vmatpush1.msra.mxu0 0.0
    %124 = vmatprep.subr.mxu0 0.0
    %125 = vmatpush1.msra.mxu0 0.0
    %126 = vmatprep.subr.mxu0 0.0
    %127 = vmatpush1.msra.mxu0 0.0
    %128 = vmatprep.subr.mxu0 0.0
    %129 = vmatpush1.msra.mxu0 0.0
    %130 = vmatprep.subr.mxu0 0.0
    %131 = vmatpush1.msra.mxu0 0.0
    %132 = vmatprep.subr.mxu0 0.0
    %133 = vmatpush1.msra.mxu0 0.0
    %134 = vmatprep.subr.mxu0 0.0
    %135 = vmatpush1.msra.mxu0 0.0
    %136 = vmatprep.subr.mxu0 0.0
    %137 = vmatpush1.msra.mxu0 0.0
    %138 = vmatprep.subr.mxu0 0.0
    %139 = vmatpush1.msra.mxu0 0.0
    %140 = vmatprep.subr.mxu0 0.0
    %141 = vmatpush1.msra.mxu0 0.0
    %142 = vmatprep.subr.mxu0 0.0
    %143 = vmatpush1.msra.mxu0 0.0
    %144 = vmatprep.subr.mxu0 0.0
    %145 = vmatpush1.msra.mxu0 0.0
    %146 = vmatprep.subr.mxu0 0.0
    %147 = vmatpush1.msra.mxu0 0.0
    %148 = vmatprep.subr.mxu0 0.0
    %149 = vmatpush1.msra.mxu0 0.0
    %150 = vmatprep.subr.mxu0 0.0
    %151 = vmatpush1.msra.mxu0 0.0
    %152 = vmatprep.subr.mxu0 0.0
    %153 = vmatpush1.msra.mxu0 0.0
    %154 = vmatprep.subr.mxu0 0.0
    %155 = vmatpush1.msra.mxu0 0.0
    %156 = vmatprep.subr.mxu0 0.0
    %157 = vmatpush1.msra.mxu0 0.0
    %158 = vmatprep.subr.mxu0 0.0
    %159 = vmatpush1.msra.mxu0 0.0
    %160 = vmatprep.subr.mxu0 0.0
    %161 = vmatpush1.msra.mxu0 0.0
    %162 = vmatprep.subr.mxu0 0.0
    %163 = vmatpush1.msra.mxu0 0.0
    %164 = vmatprep.subr.mxu0 0.0
    %165 = vmatpush1.msra.mxu0 0.0
    %166 = vmatprep.subr.mxu0 0.0
    %167 = vmatpush1.msra.mxu0 0.0
    %168 = vmatprep.subr.mxu0 0.0
    %169 = vmatpush1.msra.mxu0 0.0
    %170 = vmatprep.subr.mxu0 0.0
    %171 = vmatpush1.msra.mxu0 0.0
    %172 = vmatprep.subr.mxu0 0.0
    %173 = vmatpush1.msra.mxu0 0.0
    %174 = vmatprep.subr.mxu0 0.0
    %175 = vmatpush1.msra.mxu0 0.0
    %176 = vmatprep.subr.mxu0 0.0
    %177 = vmatpush1.msra.mxu0 0.0
    %178 = vmatprep.mubr.f32.mxu0 0.0
    %179 = vmatmul.mubr.f32.gmra.mrb[0].mxu0 %v109
    %v180 = vpop.f32.mrb[0].mxu0
    %v181 = vadd.f32 %v106, %v180
    %v182 = vpop.f32.mrb[0].mxu0
    %183 = vmatprep.mubr.f32.mxu0 0.0
    %184 = vmatmul.mubr.f32.gmra.mrb[0].mxu0 %v112
    %v185 = vpop.f32.mrb[0].mxu0
    %v186 = vadd.f32 %v106, %v185
    %v187 = vpop.f32.mrb[0].mxu0
    %188 = vdwg.mxu0
    %v189 = vmax.f32 %v181, 0.0
    %v190 = vmax.f32 %v186, 0.0
    %191 = vst [vmem:[#allocation7] sm:$0xff] %v189
    %192 = vst [vmem:[#allocation7 + $0x8] sm:$0xff] %v190
    // Predicated region
    $region30: #{tpu_custom_call.1} parent=1 // pred_check
      _
    $region31: #{tpu_custom_call.1} parent=1 // pred_check_branch
      %194 = sbr.rel (0) target = $region33
    $region32: #{tpu_custom_call.1} parent=1 // pred_region
      %s196 = ssub.s32 256, 256
      %197 = vsyncadd [#allocation4], %s196
      %s198 = sshll.u32 [#allocation7], 4
      %s199 = int_to_ptr.vmem [resolvable:$true] %s198
      %204 = dma.vmem_to_hbm [thread:$0]  %s199, 256, %s5, [#allocation4], 128, 128, 8
    $region33: #{tpu_custom_call.1} parent=1 // pred_fallthru
      _
    // Predicated region
    $region34: #{tpu_custom_call.1} parent=1 // pred_check
      _
    $region35: #{tpu_custom_call.1} parent=1 // pred_check_branch
      %206 = sbr.rel (0) target = $region37
    $region36: #{tpu_custom_call.1} parent=1 // pred_region
      %207 = dma.done [#allocation4], 256
    $region37: #{tpu_custom_call.1} parent=1 // pred_fallthru
      _
    %208 = vsyncpa [#allocation3], 1
    %209 = vsyncpa [#allocation6], 1
    %210 = vsyncpa [#allocation4], 1

</llo_original>
